<compile_context>
chip_gen: v7x
topology: tpu7x:2x2x1
jax: 0.10.0
libtpu: 0.0.40
codegen_flags: <defaults>
</compile_context>

<pallas_src>
from functools import partial

import jax
import jax.numpy as jnp
from jax import lax
from jax.experimental import pallas as pl
from jax.experimental.pallas import tpu as pltpu

# Physical constants (the PyTorch module references module-level globals l1,l2,m1,m2,g,k2)
L1, L2, M1, M2, G_ACC, K2 = 1.0, 1.0, 1.0, 1.0, 9.81, 0.5
HIDDEN = 32


def _pendulum_kernel(x_ref, w1a_ref, w1b_ref, b1_ref, w2_ref, T_ref, o_ref):
    x = x_ref[...].astype(jnp.float32)            # (4, TB): rows q1, q2, p1, p2
    q1 = x[0:1, :]                                # (1, TB) sublane row reads
    q2 = x[1:2, :]
    p1 = x[2:3, :]
    p2 = x[3:4, :]

    # ---- energy shaping: u = -dV/dq for V(q) = tanh(q W1 + b1) W2 + b2 ----
    # VPU broadcast path (no MXU): hidden on sublanes, batch on lanes.
    w1a = w1a_ref[...]                            # (H, 1)  = W1[0, :]^T
    w1b = w1b_ref[...]                            # (H, 1)  = W1[1, :]^T
    b1 = b1_ref[...]                              # (H, 1)
    w2 = w2_ref[...]                              # (H, 1)
    pre = w1a * q1 + w1b * q2 + b1                # (H, TB)
    th = jnp.tanh(pre)                            # (H, TB)  (EUP)
    gate = (1.0 - th * th) * w2                   # (H, TB)
    dVdq1 = jnp.sum(gate * w1a, axis=0, keepdims=True)   # (1, TB) sublane reduce
    dVdq2 = jnp.sum(gate * w1b, axis=0, keepdims=True)   # (1, TB)
    u1 = -dVdq1
    u2 = -dVdq2

    # ---- double pendulum dynamics (exact transcription of _dynamics) ----
    cq2 = jnp.cos(q2)
    sq2 = jnp.sin(q2)
    sq2sq = sq2 * sq2
    c2q2 = 1.0 - 2.0 * sq2sq                      # cos(2*q2) without another EUP op
    sin_q1 = jnp.sin(q1)
    sin_q12 = jnp.sin(q1 + q2)

    DET = (L1 ** 2 * L2 ** 2 * M2 ** 2) * (-(cq2 * cq2)) \
        + L1 ** 2 * L2 ** 2 * M2 ** 2 + L1 ** 2 * L2 ** 2 * M1 * M2
    inv_DET = 1.0 / DET                           # single reciprocal, reused 2x
    A = L1 * cq2 + L2

    dq1dt = (L2 ** 2 * M2 * p1 - L2 * M2 * p2 * A) * inv_DET
    dq2dt = (p2 * (2 * L2 * L1 * M2 * cq2 + L1 ** 2 * (M1 + M2) + L2 ** 2 * M2)
             - L2 * M2 * p1 * A) * inv_DET
    dp1dt = -G_ACC * (sin_q12 * L2 * M2 + sin_q1 * L1 * (M1 + M2)) + u1

    msum = M1 + sq2sq * M2
    msq = msum * msum                             # (M1 + sin^2 q2 * M2)^2, reused 2x
    inv_pref = 1.0 / (L1 ** 2 * L2 ** 2 * msq)
    dp2dt = -(
        inv_pref
        * (
            -p2 * p2 * sq2 * (cq2 * L1 + L2) * (cq2 * L2 * M2 + L1 * (M1 + M2))
            + 0.5 * p1 * p2 * sq2 * L2
            * (4 * cq2 * L2 * M2 + L1 * (2 * M1 + (3 + c2q2) * M2))
            + L2 ** 2
            * (
                -cq2 * p1 * p1 * sq2 * M2
                + L1 ** 2 * msq
                * (G_ACC * sin_q12 * L2 * M2 - K2 * (jnp.pi - 2 * q2))
            )
        )
    ) + u2

    absT = jnp.abs(T_ref[0])                      # scalar from SMEM
    # Lane-dense row writes (no lane concat / masked lane stores).
    o_ref[0:1, :] = (absT * dq1dt).astype(o_ref.dtype)
    o_ref[1:2, :] = (absT * dq2dt).astype(o_ref.dtype)
    o_ref[2:3, :] = (absT * dp1dt).astype(o_ref.dtype)
    o_ref[3:4, :] = (absT * dp2dt).astype(o_ref.dtype)


@partial(jax.jit, static_argnames=("block_b",))
def controlled_system_forward(x, w1, b1, w2, b2, T, *, block_b=128):
    """dxdt = |T| * dynamics(q, p, u) with u = -dV/dq.

    x: (B, 4) float32 rows [q1, q2, p1, p2].  b2 is accepted for signature parity
    with the torch module's V but is unused (dV/dq does not depend on b2).
    """
    del b2  # unused by the forward path (gradient of V is independent of b2)
    B = x.shape[0]
    H = w1.shape[1]
    n_blocks = pl.cdiv(B, block_b)
    Bpad = n_blocks * block_b

    # Layout plumbing in the wrapper (free): transpose to (state, batch), pad batch.
    xt = jnp.transpose(x)                                  # (4, B)
    if Bpad != B:
        xt = jnp.pad(xt, ((0, 0), (0, Bpad - B)))

    # Pre-sliced / pre-transposed V-network params: hidden on sublanes, no in-kernel .T
    w1a = w1[0].reshape(H, 1)
    w1b = w1[1].reshape(H, 1)
    b1c = b1.reshape(H, 1)
    w2c = w2.reshape(H, 1)
    Tc = T.reshape(1).astype(jnp.float32)

    out_t = pl.pallas_call(
        _pendulum_kernel,
        out_shape=jax.ShapeDtypeStruct((4, Bpad), x.dtype),
        grid_spec=pltpu.PrefetchScalarGridSpec(
            num_scalar_prefetch=0,
            grid=(n_blocks,),
            in_specs=[
                pl.BlockSpec((4, block_b), lambda i: (0, i)),           # x  (4, TB)
                pl.BlockSpec((H, 1), lambda i: (0, 0)),                 # w1 row 0
                pl.BlockSpec((H, 1), lambda i: (0, 0)),                 # w1 row 1
                pl.BlockSpec((H, 1), lambda i: (0, 0)),                 # b1
                pl.BlockSpec((H, 1), lambda i: (0, 0)),                 # w2
                pl.BlockSpec(memory_space=pltpu.MemorySpace.SMEM),      # T scalar
            ],
            out_specs=pl.BlockSpec((4, block_b), lambda i: (0, i)),
        ),
        compiler_params=pltpu.CompilerParams(
            dimension_semantics=("parallel",)),
    )(xt, w1a, w1b, b1c, w2c, Tc)

    return jnp.transpose(out_t[:, :B])                      # back to (B, 4)


def _reference_forward(x, w1, b1, w2, T):
    """Pure-JAX reference mirroring the PyTorch forward (V_only=False)."""
    q1, q2, p1, p2 = x[:, 0:1], x[:, 1:2], x[:, 2:3], x[:, 3:4]
    q = jnp.concatenate([q1, q2], axis=1)
    pre = jnp.dot(q, w1, precision=lax.Precision.HIGHEST) + b1
    th = jnp.tanh(pre)
    dVdq = jnp.dot((1.0 - th * th) * w2.T, w1.T, precision=lax.Precision.HIGHEST)
    u = -dVdq
    u1, u2 = u[:, 0:1], u[:, 1:2]
    cq2, sq2 = jnp.cos(q2), jnp.sin(q2)
    DET = (L1 ** 2 * L2 ** 2 * M2 ** 2) * (-(cq2 ** 2)) \
        + L1 ** 2 * L2 ** 2 * M2 ** 2 + L1 ** 2 * L2 ** 2 * M1 * M2
    dq1dt = L2 ** 2 * M2 * p1 / DET - L2 * M2 * p2 * (L1 * cq2 + L2) / DET
    dq2dt = p2 * (2 * L2 * L1 * M2 * cq2 + L1 ** 2 * (M1 + M2) + L2 ** 2 * M2) / DET \
        - L2 * M2 * p1 * (L1 * cq2 + L2) / DET
    dp1dt = -G_ACC * (jnp.sin(q1 + q2) * L2 * M2 + jnp.sin(q1) * L1 * (M1 + M2)) + u1
    dp2dt = -(
        1.0 / (L1 ** 2 * L2 ** 2 * (M1 + sq2 ** 2 * M2) ** 2)
        * (
            -p2 ** 2 * sq2 * (cq2 * L1 + L2) * (cq2 * L2 * M2 + L1 * (M1 + M2))
            + 0.5 * p1 * p2 * sq2 * L2
            * (4 * cq2 * L2 * M2 + L1 * (2 * M1 + (3 + jnp.cos(2 * q2)) * M2))
            + L2 ** 2
            * (
                -cq2 * p1 ** 2 * sq2 * M2
                + L1 ** 2 * (M1 + sq2 ** 2 * M2) ** 2
                * (G_ACC * jnp.sin(q1 + q2) * L2 * M2 - K2 * (jnp.pi - 2 * q2))
            )
        )
    ) + u2
    return jnp.abs(T[0]) * jnp.concatenate([dq1dt, dq2dt, dp1dt, dp2dt], axis=1)


if __name__ == "__main__":
    key = jax.random.PRNGKey(0)
    k_x, k_w1, k_b1, k_w2, k_b2 = jax.random.split(key, 5)

    B = 8  # batch of states (padded to 128 lanes inside the wrapper)
    x = jax.random.normal(k_x, (B, 4), dtype=jnp.float32)

    # Deterministic V-network parameters (Linear(2,H) -> Tanh -> Linear(H,1)).
    w1 = jax.random.normal(k_w1, (2, HIDDEN), dtype=jnp.float32) * 0.5
    b1 = jax.random.normal(k_b1, (1, HIDDEN), dtype=jnp.float32) * 0.1
    w2 = jax.random.normal(k_w2, (HIDDEN, 1), dtype=jnp.float32) * 0.5
    b2 = jax.random.normal(k_b2, (1, 1), dtype=jnp.float32) * 0.1  # unused by forward
    T = jnp.array([1.0], dtype=jnp.float32)  # T_initial = 1.0

    # t (time) is unused by the forward pass, matching the PyTorch module.
    out = controlled_system_forward(x, w1, b1, w2, b2, T)
    out = jax.block_until_ready(out)

    ref = _reference_forward(x, w1, b1, w2, T)
    assert out.shape == (B, 4)
    assert jnp.allclose(out, ref, rtol=1e-4, atol=1e-4), "mismatch vs reference"

    # TODO(synk): V_only=True branch (returns [V(q), -dV/dq]) not exercised here; the
    # same (H, B) broadcast machinery would cover it with a (3, B) output.
    print("KERNEL_OK")
</pallas_src>

<mosaic_0001>
module attributes {stable_mosaic.version = 11 : i64} {
  func.func @_pendulum_kernel(%arg0: i32, %arg1: memref<4x128xf32, #tpu.memory_space<vmem>>, %arg2: memref<32x1xf32, #tpu.memory_space<vmem>>, %arg3: memref<32x1xf32, #tpu.memory_space<vmem>>, %arg4: memref<32x1xf32, #tpu.memory_space<vmem>>, %arg5: memref<32x1xf32, #tpu.memory_space<vmem>>, %arg6: memref<1xf32, #tpu.memory_space<smem>>, %arg7: memref<4x128xf32, #tpu.memory_space<vmem>>) attributes {dimension_semantics = [#tpu.dimension_semantics<parallel>], iteration_bounds = array<i64: 1>, scalar_prefetch = 0 : i64, scratch_operands = 0 : i64, tpu.core_type = #tpu.core_type<tc>, window_params = [{transform_indices = @transform_0, window_bounds = array<i64: 4, 128>}, {pipeline_mode = #tpu.pipeline_mode<synchronous>, transform_indices = @transform_1, window_bounds = array<i64: 32, 1>}, {pipeline_mode = #tpu.pipeline_mode<synchronous>, transform_indices = @transform_2, window_bounds = array<i64: 32, 1>}, {pipeline_mode = #tpu.pipeline_mode<synchronous>, transform_indices = @transform_3, window_bounds = array<i64: 32, 1>}, {pipeline_mode = #tpu.pipeline_mode<synchronous>, transform_indices = @transform_4, window_bounds = array<i64: 32, 1>}, {transform_indices = @transform_5, window_bounds = array<i64: 1>}, {transform_indices = @transform_6, window_bounds = array<i64: 4, 128>}]} {
    %c0 = arith.constant 0 : index
    %c0_0 = arith.constant 0 : index
    %0 = vector.load %arg1[%c0, %c0_0] : memref<4x128xf32, #tpu.memory_space<vmem>>, vector<4x128xf32>
    %1 = vector.extract_strided_slice %0 {offsets = [0, 0], sizes = [1, 128], strides = [1, 1]} : vector<4x128xf32> to vector<1x128xf32>
    %2 = vector.extract_strided_slice %0 {offsets = [1, 0], sizes = [1, 128], strides = [1, 1]} : vector<4x128xf32> to vector<1x128xf32>
    %3 = vector.extract_strided_slice %0 {offsets = [2, 0], sizes = [1, 128], strides = [1, 1]} : vector<4x128xf32> to vector<1x128xf32>
    %4 = vector.extract_strided_slice %0 {offsets = [3, 0], sizes = [1, 128], strides = [1, 1]} : vector<4x128xf32> to vector<1x128xf32>
    %c0_1 = arith.constant 0 : index
    %c0_2 = arith.constant 0 : index
    %5 = vector.load %arg2[%c0_1, %c0_2] : memref<32x1xf32, #tpu.memory_space<vmem>>, vector<32x1xf32>
    %c0_3 = arith.constant 0 : index
    %c0_4 = arith.constant 0 : index
    %6 = vector.load %arg3[%c0_3, %c0_4] : memref<32x1xf32, #tpu.memory_space<vmem>>, vector<32x1xf32>
    %c0_5 = arith.constant 0 : index
    %c0_6 = arith.constant 0 : index
    %7 = vector.load %arg4[%c0_5, %c0_6] : memref<32x1xf32, #tpu.memory_space<vmem>>, vector<32x1xf32>
    %c0_7 = arith.constant 0 : index
    %c0_8 = arith.constant 0 : index
    %8 = vector.load %arg5[%c0_7, %c0_8] : memref<32x1xf32, #tpu.memory_space<vmem>>, vector<32x1xf32>
    %9 = vector.broadcast %5 : vector<32x1xf32> to vector<32x128xf32>
    %10 = vector.broadcast %1 : vector<1x128xf32> to vector<32x128xf32>
    %11 = arith.mulf %9, %10 : vector<32x128xf32>
    %12 = vector.broadcast %6 : vector<32x1xf32> to vector<32x128xf32>
    %13 = vector.broadcast %2 : vector<1x128xf32> to vector<32x128xf32>
    %14 = arith.mulf %12, %13 : vector<32x128xf32>
    %15 = arith.addf %11, %14 : vector<32x128xf32>
    %16 = vector.broadcast %7 : vector<32x1xf32> to vector<32x128xf32>
    %17 = arith.addf %15, %16 : vector<32x128xf32>
    %18 = math.tanh %17 : vector<32x128xf32>
    %19 = arith.mulf %18, %18 : vector<32x128xf32>
    %cst = arith.constant 1.000000e+00 : f32
    %20 = vector.broadcast %cst : f32 to vector<32x128xf32>
    %21 = arith.subf %20, %19 : vector<32x128xf32>
    %22 = vector.broadcast %8 : vector<32x1xf32> to vector<32x128xf32>
    %23 = arith.mulf %21, %22 : vector<32x128xf32>
    %24 = vector.broadcast %5 : vector<32x1xf32> to vector<32x128xf32>
    %25 = arith.mulf %23, %24 : vector<32x128xf32>
    %cst_9 = arith.constant dense<0.000000e+00> : vector<128xf32>
    %26 = vector.multi_reduction <add>, %25, %cst_9 [0] : vector<32x128xf32> to vector<128xf32>
    %27 = vector.shape_cast %26 : vector<128xf32> to vector<1x128xf32>
    %28 = vector.broadcast %6 : vector<32x1xf32> to vector<32x128xf32>
    %29 = arith.mulf %23, %28 : vector<32x128xf32>
    %cst_10 = arith.constant dense<0.000000e+00> : vector<128xf32>
    %30 = vector.multi_reduction <add>, %29, %cst_10 [0] : vector<32x128xf32> to vector<128xf32>
    %31 = vector.shape_cast %30 : vector<128xf32> to vector<1x128xf32>
    %cst_11 = arith.constant 0.000000e+00 : f32
    %32 = vector.broadcast %cst_11 : f32 to vector<1x128xf32>
    %33 = arith.subf %32, %27 : vector<1x128xf32>
    %cst_12 = arith.constant 0.000000e+00 : f32
    %34 = vector.broadcast %cst_12 : f32 to vector<1x128xf32>
    %35 = arith.subf %34, %31 : vector<1x128xf32>
    %36 = math.cos %2 : vector<1x128xf32>
    %37 = math.sin %2 : vector<1x128xf32>
    %38 = arith.mulf %37, %37 : vector<1x128xf32>
    %cst_13 = arith.constant 2.000000e+00 : f32
    %39 = vector.broadcast %cst_13 : f32 to vector<1x128xf32>
    %40 = arith.mulf %39, %38 : vector<1x128xf32>
    %cst_14 = arith.constant 1.000000e+00 : f32
    %41 = vector.broadcast %cst_14 : f32 to vector<1x128xf32>
    %42 = arith.subf %41, %40 : vector<1x128xf32>
    %43 = math.sin %1 : vector<1x128xf32>
    %44 = arith.addf %1, %2 : vector<1x128xf32>
    %45 = math.sin %44 : vector<1x128xf32>
    %46 = arith.mulf %36, %36 : vector<1x128xf32>
    %cst_15 = arith.constant 0.000000e+00 : f32
    %47 = vector.broadcast %cst_15 : f32 to vector<1x128xf32>
    %48 = arith.subf %47, %46 : vector<1x128xf32>
    %cst_16 = arith.constant 1.000000e+00 : f32
    %49 = vector.broadcast %cst_16 : f32 to vector<1x128xf32>
    %50 = arith.mulf %49, %48 : vector<1x128xf32>
    %cst_17 = arith.constant 1.000000e+00 : f32
    %51 = vector.broadcast %cst_17 : f32 to vector<1x128xf32>
    %52 = arith.addf %50, %51 : vector<1x128xf32>
    %cst_18 = arith.constant 1.000000e+00 : f32
    %53 = vector.broadcast %cst_18 : f32 to vector<1x128xf32>
    %54 = arith.addf %52, %53 : vector<1x128xf32>
    %cst_19 = arith.constant 1.000000e+00 : f32
    %55 = vector.broadcast %cst_19 : f32 to vector<1x128xf32>
    %56 = arith.divf %55, %54 : vector<1x128xf32>
    %cst_20 = arith.constant 1.000000e+00 : f32
    %57 = vector.broadcast %cst_20 : f32 to vector<1x128xf32>
    %58 = arith.mulf %57, %36 : vector<1x128xf32>
    %cst_21 = arith.constant 1.000000e+00 : f32
    %59 = vector.broadcast %cst_21 : f32 to vector<1x128xf32>
    %60 = arith.addf %58, %59 : vector<1x128xf32>
    %cst_22 = arith.constant 1.000000e+00 : f32
    %61 = vector.broadcast %cst_22 : f32 to vector<1x128xf32>
    %62 = arith.mulf %61, %3 : vector<1x128xf32>
    %cst_23 = arith.constant 1.000000e+00 : f32
    %63 = vector.broadcast %cst_23 : f32 to vector<1x128xf32>
    %64 = arith.mulf %63, %4 : vector<1x128xf32>
    %65 = arith.mulf %64, %60 : vector<1x128xf32>
    %66 = arith.subf %62, %65 : vector<1x128xf32>
    %67 = arith.mulf %66, %56 : vector<1x128xf32>
    %cst_24 = arith.constant 2.000000e+00 : f32
    %68 = vector.broadcast %cst_24 : f32 to vector<1x128xf32>
    %69 = arith.mulf %68, %36 : vector<1x128xf32>
    %cst_25 = arith.constant 2.000000e+00 : f32
    %70 = vector.broadcast %cst_25 : f32 to vector<1x128xf32>
    %71 = arith.addf %69, %70 : vector<1x128xf32>
    %cst_26 = arith.constant 1.000000e+00 : f32
    %72 = vector.broadcast %cst_26 : f32 to vector<1x128xf32>
    %73 = arith.addf %71, %72 : vector<1x128xf32>
    %74 = arith.mulf %4, %73 : vector<1x128xf32>
    %cst_27 = arith.constant 1.000000e+00 : f32
    %75 = vector.broadcast %cst_27 : f32 to vector<1x128xf32>
    %76 = arith.mulf %75, %3 : vector<1x128xf32>
    %77 = arith.mulf %76, %60 : vector<1x128xf32>
    %78 = arith.subf %74, %77 : vector<1x128xf32>
    %79 = arith.mulf %78, %56 : vector<1x128xf32>
    %cst_28 = arith.constant 1.000000e+00 : f32
    %80 = vector.broadcast %cst_28 : f32 to vector<1x128xf32>
    %81 = arith.mulf %45, %80 : vector<1x128xf32>
    %cst_29 = arith.constant 1.000000e+00 : f32
    %82 = vector.broadcast %cst_29 : f32 to vector<1x128xf32>
    %83 = arith.mulf %81, %82 : vector<1x128xf32>
    %cst_30 = arith.constant 1.000000e+00 : f32
    %84 = vector.broadcast %cst_30 : f32 to vector<1x128xf32>
    %85 = arith.mulf %43, %84 : vector<1x128xf32>
    %cst_31 = arith.constant 2.000000e+00 : f32
    %86 = vector.broadcast %cst_31 : f32 to vector<1x128xf32>
    %87 = arith.mulf %85, %86 : vector<1x128xf32>
    %88 = arith.addf %83, %87 : vector<1x128xf32>
    %cst_32 = arith.constant -9.810000e+00 : f32
    %89 = vector.broadcast %cst_32 : f32 to vector<1x128xf32>
    %90 = arith.mulf %89, %88 : vector<1x128xf32>
    %91 = arith.addf %90, %33 : vector<1x128xf32>
    %cst_33 = arith.constant 1.000000e+00 : f32
    %92 = vector.broadcast %cst_33 : f32 to vector<1x128xf32>
    %93 = arith.mulf %38, %92 : vector<1x128xf32>
    %cst_34 = arith.constant 1.000000e+00 : f32
    %94 = vector.broadcast %cst_34 : f32 to vector<1x128xf32>
    %95 = arith.addf %94, %93 : vector<1x128xf32>
    %96 = arith.mulf %95, %95 : vector<1x128xf32>
    %cst_35 = arith.constant 1.000000e+00 : f32
    %97 = vector.broadcast %cst_35 : f32 to vector<1x128xf32>
    %98 = arith.mulf %97, %96 : vector<1x128xf32>
    %cst_36 = arith.constant 1.000000e+00 : f32
    %99 = vector.broadcast %cst_36 : f32 to vector<1x128xf32>
    %100 = arith.divf %99, %98 : vector<1x128xf32>
    %cst_37 = arith.constant 0.000000e+00 : f32
    %101 = vector.broadcast %cst_37 : f32 to vector<1x128xf32>
    %102 = arith.subf %101, %4 : vector<1x128xf32>
    %103 = arith.mulf %102, %4 : vector<1x128xf32>
    %104 = arith.mulf %103, %37 : vector<1x128xf32>
    %cst_38 = arith.constant 1.000000e+00 : f32
    %105 = vector.broadcast %cst_38 : f32 to vector<1x128xf32>
    %106 = arith.mulf %36, %105 : vector<1x128xf32>
    %cst_39 = arith.constant 1.000000e+00 : f32
    %107 = vector.broadcast %cst_39 : f32 to vector<1x128xf32>
    %108 = arith.addf %106, %107 : vector<1x128xf32>
    %109 = arith.mulf %104, %108 : vector<1x128xf32>
    %cst_40 = arith.constant 1.000000e+00 : f32
    %110 = vector.broadcast %cst_40 : f32 to vector<1x128xf32>
    %111 = arith.mulf %36, %110 : vector<1x128xf32>
    %cst_41 = arith.constant 1.000000e+00 : f32
    %112 = vector.broadcast %cst_41 : f32 to vector<1x128xf32>
    %113 = arith.mulf %111, %112 : vector<1x128xf32>
    %cst_42 = arith.constant 2.000000e+00 : f32
    %114 = vector.broadcast %cst_42 : f32 to vector<1x128xf32>
    %115 = arith.addf %113, %114 : vector<1x128xf32>
    %116 = arith.mulf %109, %115 : vector<1x128xf32>
    %cst_43 = arith.constant 5.000000e-01 : f32
    %117 = vector.broadcast %cst_43 : f32 to vector<1x128xf32>
    %118 = arith.mulf %117, %3 : vector<1x128xf32>
    %119 = arith.mulf %118, %4 : vector<1x128xf32>
    %120 = arith.mulf %119, %37 : vector<1x128xf32>
    %cst_44 = arith.constant 1.000000e+00 : f32
    %121 = vector.broadcast %cst_44 : f32 to vector<1x128xf32>
    %122 = arith.mulf %120, %121 : vector<1x128xf32>
    %cst_45 = arith.constant 4.000000e+00 : f32
    %123 = vector.broadcast %cst_45 : f32 to vector<1x128xf32>
    %124 = arith.mulf %123, %36 : vector<1x128xf32>
    %cst_46 = arith.constant 1.000000e+00 : f32
    %125 = vector.broadcast %cst_46 : f32 to vector<1x128xf32>
    %126 = arith.mulf %124, %125 : vector<1x128xf32>
    %cst_47 = arith.constant 1.000000e+00 : f32
    %127 = vector.broadcast %cst_47 : f32 to vector<1x128xf32>
    %128 = arith.mulf %126, %127 : vector<1x128xf32>
    %cst_48 = arith.constant 3.000000e+00 : f32
    %129 = vector.broadcast %cst_48 : f32 to vector<1x128xf32>
    %130 = arith.addf %129, %42 : vector<1x128xf32>
    %cst_49 = arith.constant 1.000000e+00 : f32
    %131 = vector.broadcast %cst_49 : f32 to vector<1x128xf32>
    %132 = arith.mulf %130, %131 : vector<1x128xf32>
    %cst_50 = arith.constant 2.000000e+00 : f32
    %133 = vector.broadcast %cst_50 : f32 to vector<1x128xf32>
    %134 = arith.addf %133, %132 : vector<1x128xf32>
    %cst_51 = arith.constant 1.000000e+00 : f32
    %135 = vector.broadcast %cst_51 : f32 to vector<1x128xf32>
    %136 = arith.mulf %135, %134 : vector<1x128xf32>
    %137 = arith.addf %128, %136 : vector<1x128xf32>
    %138 = arith.mulf %122, %137 : vector<1x128xf32>
    %139 = arith.addf %116, %138 : vector<1x128xf32>
    %cst_52 = arith.constant 0.000000e+00 : f32
    %140 = vector.broadcast %cst_52 : f32 to vector<1x128xf32>
    %141 = arith.subf %140, %36 : vector<1x128xf32>
    %142 = arith.mulf %141, %3 : vector<1x128xf32>
    %143 = arith.mulf %142, %3 : vector<1x128xf32>
    %144 = arith.mulf %143, %37 : vector<1x128xf32>
    %cst_53 = arith.constant 1.000000e+00 : f32
    %145 = vector.broadcast %cst_53 : f32 to vector<1x128xf32>
    %146 = arith.mulf %144, %145 : vector<1x128xf32>
    %cst_54 = arith.constant 1.000000e+00 : f32
    %147 = vector.broadcast %cst_54 : f32 to vector<1x128xf32>
    %148 = arith.mulf %147, %96 : vector<1x128xf32>
    %cst_55 = arith.constant 9.810000e+00 : f32
    %149 = vector.broadcast %cst_55 : f32 to vector<1x128xf32>
    %150 = arith.mulf %149, %45 : vector<1x128xf32>
    %cst_56 = arith.constant 1.000000e+00 : f32
    %151 = vector.broadcast %cst_56 : f32 to vector<1x128xf32>
    %152 = arith.mulf %150, %151 : vector<1x128xf32>
    %cst_57 = arith.constant 1.000000e+00 : f32
    %153 = vector.broadcast %cst_57 : f32 to vector<1x128xf32>
    %154 = arith.mulf %152, %153 : vector<1x128xf32>
    %cst_58 = arith.constant 2.000000e+00 : f32
    %155 = vector.broadcast %cst_58 : f32 to vector<1x128xf32>
    %156 = arith.mulf %155, %2 : vector<1x128xf32>
    %cst_59 = arith.constant 3.14159274 : f32
    %157 = vector.broadcast %cst_59 : f32 to vector<1x128xf32>
    %158 = arith.subf %157, %156 : vector<1x128xf32>
    %cst_60 = arith.constant 5.000000e-01 : f32
    %159 = vector.broadcast %cst_60 : f32 to vector<1x128xf32>
    %160 = arith.mulf %159, %158 : vector<1x128xf32>
    %161 = arith.subf %154, %160 : vector<1x128xf32>
    %162 = arith.mulf %148, %161 : vector<1x128xf32>
    %163 = arith.addf %146, %162 : vector<1x128xf32>
    %cst_61 = arith.constant 1.000000e+00 : f32
    %164 = vector.broadcast %cst_61 : f32 to vector<1x128xf32>
    %165 = arith.mulf %164, %163 : vector<1x128xf32>
    %166 = arith.addf %139, %165 : vector<1x128xf32>
    %167 = arith.mulf %100, %166 : vector<1x128xf32>
    %cst_62 = arith.constant 0.000000e+00 : f32
    %168 = vector.broadcast %cst_62 : f32 to vector<1x128xf32>
    %169 = arith.subf %168, %167 : vector<1x128xf32>
    %170 = arith.addf %169, %35 : vector<1x128xf32>
    %c0_63 = arith.constant 0 : index
    %171 = memref.load %arg6[%c0_63] : memref<1xf32, #tpu.memory_space<smem>>
    %172 = math.absf %171 : f32
    %173 = vector.broadcast %172 : f32 to vector<1x128xf32>
    %174 = arith.mulf %173, %67 : vector<1x128xf32>
    %c0_64 = arith.constant 0 : index
    %c0_65 = arith.constant 0 : index
    %175 = vector.load %arg7[%c0_64, %c0_65] : memref<4x128xf32, #tpu.memory_space<vmem>>, vector<1x128xf32>
    tpu.vector_store %arg7[%c0_64, %c0_65], %174 {strides = array<i32>} : memref<4x128xf32, #tpu.memory_space<vmem>>, vector<1x128xf32>,
    %176 = vector.broadcast %172 : f32 to vector<1x128xf32>
    %177 = arith.mulf %176, %79 : vector<1x128xf32>
    %c1 = arith.constant 1 : index
    %c0_66 = arith.constant 0 : index
    %178 = vector.load %arg7[%c1, %c0_66] : memref<4x128xf32, #tpu.memory_space<vmem>>, vector<1x128xf32>
    tpu.vector_store %arg7[%c1, %c0_66], %177 {strides = array<i32>} : memref<4x128xf32, #tpu.memory_space<vmem>>, vector<1x128xf32>,
    %179 = vector.broadcast %172 : f32 to vector<1x128xf32>
    %180 = arith.mulf %179, %91 : vector<1x128xf32>
    %c2 = arith.constant 2 : index
    %c0_67 = arith.constant 0 : index
    %181 = vector.load %arg7[%c2, %c0_67] : memref<4x128xf32, #tpu.memory_space<vmem>>, vector<1x128xf32>
    tpu.vector_store %arg7[%c2, %c0_67], %180 {strides = array<i32>} : memref<4x128xf32, #tpu.memory_space<vmem>>, vector<1x128xf32>,
    %182 = vector.broadcast %172 : f32 to vector<1x128xf32>
    %183 = arith.mulf %182, %170 : vector<1x128xf32>
    %c3 = arith.constant 3 : index
    %c0_68 = arith.constant 0 : index
    %184 = vector.load %arg7[%c3, %c0_68] : memref<4x128xf32, #tpu.memory_space<vmem>>, vector<1x128xf32>
    tpu.vector_store %arg7[%c3, %c0_68], %183 {strides = array<i32>} : memref<4x128xf32, #tpu.memory_space<vmem>>, vector<1x128xf32>,
    return
  }
  func.func @transform_0(%arg0: i32) -> (i32, i32) {
    %c0_i32 = arith.constant 0 : i32
    %c0_i32_0 = arith.constant 0 : i32
    return %c0_i32, %arg0 : i32, i32
  }
  func.func @transform_1(%arg0: i32) -> (i32, i32) {
    %c0_i32 = arith.constant 0 : i32
    %c0_i32_0 = arith.constant 0 : i32
    %c0_i32_1 = arith.constant 0 : i32
    return %c0_i32, %c0_i32_0 : i32, i32
  }
  func.func @transform_2(%arg0: i32) -> (i32, i32) {
    %c0_i32 = arith.constant 0 : i32
    %c0_i32_0 = arith.constant 0 : i32
    %c0_i32_1 = arith.constant 0 : i32
    return %c0_i32, %c0_i32_0 : i32, i32
  }
  func.func @transform_3(%arg0: i32) -> (i32, i32) {
    %c0_i32 = arith.constant 0 : i32
    %c0_i32_0 = arith.constant 0 : i32
    %c0_i32_1 = arith.constant 0 : i32
    return %c0_i32, %c0_i32_0 : i32, i32
  }
  func.func @transform_4(%arg0: i32) -> (i32, i32) {
    %c0_i32 = arith.constant 0 : i32
    %c0_i32_0 = arith.constant 0 : i32
    %c0_i32_1 = arith.constant 0 : i32
    return %c0_i32, %c0_i32_0 : i32, i32
  }
  func.func @transform_5(%arg0: i32) -> i32 {
    %c0_i32 = arith.constant 0 : i32
    %c0_i32_0 = arith.constant 0 : i32
    return %c0_i32 : i32
  }
  func.func @transform_6(%arg0: i32) -> (i32, i32) {
    %c0_i32 = arith.constant 0 : i32
    %c0_i32_0 = arith.constant 0 : i32
    return %c0_i32, %arg0 : i32, i32
  }
}

</mosaic_0001>

<llo_original>
// kernel: controlled_system_forward.1
$region0: #{controlled_system_forward.1}
  #allocation0 [shape = 'u32[]', space=smem, size = 0x4, offset = 0x4, fixed_abs, tag = 'smem constant byte address 0x4 - core index']
  #allocation1 [shape = 'u32[144,128]{1,0:T(1,128)}', space=vmem, size = 0x12000, scoped, tag = 'internal scratch']
  #allocation2 [shape = 'f32[1]{0:T(128)S(6)}', space=smem, size = 0x200, scoped, tag = 'scoped memory for controlled_system_forward.1']
  %s0 = inlined_call_operand.vmem [shape: f32[4,128], index: 0, kind: input, shape index: {}]
  %s1 = inlined_call_operand.vmem [shape: f32[32,1], index: 1, kind: input, shape index: {}]
  %s2 = inlined_call_operand.vmem [shape: f32[32,1], index: 2, kind: input, shape index: {}]
  %s3 = inlined_call_operand.vmem [shape: f32[32,1], index: 3, kind: input, shape index: {}]
  %s4 = inlined_call_operand.vmem [shape: f32[32,1], index: 4, kind: input, shape index: {}]
  %s5 = inlined_call_operand.<no memory space> [shape: f32[1], index: 5, kind: input, shape index: {}]
  %s6 = inlined_call_operand.vmem [shape: f32[4,128], index: 6, kind: output, shape index: {}]
  %s7 = sld [smem:[#allocation0]]
  $region34: #{controlled_system_forward.1} parent=0
    _
  %s9 = ssub.s32 1, %s7
  %s10 = scalar_select 0, %s9, %s7
  %11 = sst [smem:[#allocation2]] %s5
  // Predicated region
  $region2: #{controlled_system_forward.1} parent=0 // pred_check
    _
  $region3: #{controlled_system_forward.1} parent=0 // pred_check_branch
    %13 = sbr.rel (0) target = $region5
  $region4: #{controlled_system_forward.1} parent=0 // pred_region
    _
  $region5: #{controlled_system_forward.1} parent=0 // pred_fallthru
    _
  // Predicated region
  $region6: #{controlled_system_forward.1} parent=0 // pred_check
    _
  $region7: #{controlled_system_forward.1} parent=0 // pred_check_branch
    %15 = sbr.rel (0) target = $region9
  $region8: #{controlled_system_forward.1} parent=0 // pred_region
    _
  $region9: #{controlled_system_forward.1} parent=0 // pred_fallthru
    _
  // Predicated region
  $region10: #{controlled_system_forward.1} parent=0 // pred_check
    _
  $region11: #{controlled_system_forward.1} parent=0 // pred_check_branch
    %17 = sbr.rel (0) target = $region13
  $region12: #{controlled_system_forward.1} parent=0 // pred_region
    _
  $region13: #{controlled_system_forward.1} parent=0 // pred_fallthru
    _
  // Predicated region
  $region14: #{controlled_system_forward.1} parent=0 // pred_check
    _
  $region15: #{controlled_system_forward.1} parent=0 // pred_check_branch
    %19 = sbr.rel (0) target = $region17
  $region16: #{controlled_system_forward.1} parent=0 // pred_region
    _
  $region17: #{controlled_system_forward.1} parent=0 // pred_fallthru
    _
  // Predicated region
  $region18: #{controlled_system_forward.1} parent=0 // pred_check
    _
  $region19: #{controlled_system_forward.1} parent=0 // pred_check_branch
    %21 = sbr.rel (0) target = $region21
  $region20: #{controlled_system_forward.1} parent=0 // pred_region
    _
  $region21: #{controlled_system_forward.1} parent=0 // pred_fallthru
    _
  // Predicated region
  $region22: #{controlled_system_forward.1} parent=0 // pred_check
    _
  $region23: #{controlled_system_forward.1} parent=0 // pred_check_branch
    %23 = sbr.rel (0) target = $region25
  $region24: #{controlled_system_forward.1} parent=0 // pred_region
    _
  $region25: #{controlled_system_forward.1} parent=0 // pred_fallthru
    _
  %v24 = vld [vmem:[%s0] sm:$0xf]
  %v25 = vld [vmem:[%s1] sm:$0xff]
  %v26 = vld [vmem:[%s1 + $0x8] sm:$0xff]
  %v27 = vld [vmem:[%s1 + $0x10] sm:$0xff]
  %v28 = vld [vmem:[%s1 + $0x18] sm:$0xff]
  %v29 = vld [vmem:[%s2] sm:$0xff]
  %v30 = vld [vmem:[%s2 + $0x8] sm:$0xff]
  %v31 = vld [vmem:[%s2 + $0x10] sm:$0xff]
  %v32 = vld [vmem:[%s2 + $0x18] sm:$0xff]
  %v33 = vld [vmem:[%s3] sm:$0xff]
  %v34 = vld [vmem:[%s3 + $0x8] sm:$0xff]
  %v35 = vld [vmem:[%s3 + $0x10] sm:$0xff]
  %v36 = vld [vmem:[%s3 + $0x18] sm:$0xff]
  %v37 = vld [vmem:[%s4] sm:$0xff]
  %v38 = vld [vmem:[%s4 + $0x8] sm:$0xff]
  %v39 = vld [vmem:[%s4 + $0x10] sm:$0xff]
  %v40 = vld [vmem:[%s4 + $0x18] sm:$0xff]
  %42 = vset.pattern.permute.xlu0 0
  %43 = vperm.xlu0 %42, %v25
  %v44 = vpop.permute.xlu0 %43
  %47 = vset.pattern.permute.xlu0 0
  %48 = vperm.xlu0 %47, %v26
  %v49 = vpop.permute.xlu0 %48
  %52 = vset.pattern.permute.xlu0 0
  %53 = vperm.xlu0 %52, %v27
  %v54 = vpop.permute.xlu0 %53
  %57 = vset.pattern.permute.xlu0 0
  %58 = vperm.xlu0 %57, %v28
  %v59 = vpop.permute.xlu0 %58
  %v61 = vlaneseq
  %v62 = vshrl.u32 %v61, 7
  %v63 = vsub.s32 0, %v62
  %v64 = vrot.slane %v24, %v63
  %v65 = vmul.f32 %v44, %v64
  %v66 = vmul.f32 %v49, %v64
  %v67 = vmul.f32 %v54, %v64
  %v68 = vmul.f32 %v59, %v64
  %70 = vset.pattern.permute.xlu0 0
  %71 = vperm.xlu0 %70, %v29
  %v72 = vpop.permute.xlu0 %71
  %75 = vset.pattern.permute.xlu0 0
  %76 = vperm.xlu0 %75, %v30
  %v77 = vpop.permute.xlu0 %76
  %80 = vset.pattern.permute.xlu0 0
  %81 = vperm.xlu0 %80, %v31
  %v82 = vpop.permute.xlu0 %81
  %85 = vset.pattern.permute.xlu0 0
  %86 = vperm.xlu0 %85, %v32
  %v87 = vpop.permute.xlu0 %86
  %v89 = vlaneseq
  %v90 = vshrl.u32 %v89, 7
  %v91 = vsub.s32 1, %v90
  %v92 = vrot.slane %v24, %v91
  %v93 = vmul.f32 %v72, %v92
  %v94 = vmul.f32 %v77, %v92
  %v95 = vmul.f32 %v82, %v92
  %v96 = vmul.f32 %v87, %v92
  %v97 = vadd.f32 %v65, %v93
  %v98 = vadd.f32 %v66, %v94
  %v99 = vadd.f32 %v67, %v95
  %v100 = vadd.f32 %v68, %v96
  %102 = vset.pattern.permute.xlu0 0
  %103 = vperm.xlu0 %102, %v33
  %v104 = vpop.permute.xlu0 %103
  %107 = vset.pattern.permute.xlu0 0
  %108 = vperm.xlu0 %107, %v34
  %v109 = vpop.permute.xlu0 %108
  %112 = vset.pattern.permute.xlu0 0
  %113 = vperm.xlu0 %112, %v35
  %v114 = vpop.permute.xlu0 %113
  %117 = vset.pattern.permute.xlu0 0
  %118 = vperm.xlu0 %117, %v36
  %v119 = vpop.permute.xlu0 %118
  %v121 = vadd.f32 %v97, %v104
  %v122 = vadd.f32 %v98, %v109
  %v123 = vadd.f32 %v99, %v114
  %v124 = vadd.f32 %v100, %v119
  %v125 = vtanh.pop %v121
  %v126 = vtanh.pop %v122
  %v127 = vtanh.pop %v123
  %v128 = vtanh.pop %v124
  %v129 = vmul.f32 %v125, %v125
  %v130 = vmul.f32 %v126, %v126
  %v131 = vmul.f32 %v127, %v127
  %v132 = vmul.f32 %v128, %v128
  %v133 = vsub.f32 1.0, %v129
  %v134 = vsub.f32 1.0, %v130
  %v135 = vsub.f32 1.0, %v131
  %v136 = vsub.f32 1.0, %v132
  %138 = vset.pattern.permute.xlu0 0
  %139 = vperm.xlu0 %138, %v37
  %v140 = vpop.permute.xlu0 %139
  %143 = vset.pattern.permute.xlu0 0
  %144 = vperm.xlu0 %143, %v38
  %v145 = vpop.permute.xlu0 %144
  %148 = vset.pattern.permute.xlu0 0
  %149 = vperm.xlu0 %148, %v39
  %v150 = vpop.permute.xlu0 %149
  %153 = vset.pattern.permute.xlu0 0
  %154 = vperm.xlu0 %153, %v40
  %v155 = vpop.permute.xlu0 %154
  %v157 = vmul.f32 %v133, %v140
  %v158 = vmul.f32 %v134, %v145
  %v159 = vmul.f32 %v135, %v150
  %v160 = vmul.f32 %v136, %v155
  %v161 = vmul.f32 %v157, %v44
  %v162 = vmul.f32 %v158, %v49
  %v163 = vmul.f32 %v159, %v54
  %v164 = vmul.f32 %v160, %v59
  %v165 = vadd.f32 %v161, %v162
  %v166 = vadd.f32 %v165, %v163
  %v167 = vadd.f32 %v166, %v164
  %v168 = vrot.slane %v167, 4
  %v169 = vadd.f32 %v167, %v168
  %v170 = vrot.slane %v169, 2
  %v171 = vadd.f32 %v169, %v170
  %v172 = vrot.slane %v171, 1
  %v173 = vadd.f32 %v171, %v172
  %v174 = vmul.f32 %v157, %v72
  %v175 = vmul.f32 %v158, %v77
  %v176 = vmul.f32 %v159, %v82
  %v177 = vmul.f32 %v160, %v87
  %v178 = vadd.f32 %v174, %v175
  %v179 = vadd.f32 %v178, %v176
  %v180 = vadd.f32 %v179, %v177
  %v181 = vrot.slane %v180, 4
  %v182 = vadd.f32 %v180, %v181
  %v183 = vrot.slane %v182, 2
  %v184 = vadd.f32 %v182, %v183
  %v185 = vrot.slane %v184, 1
  %v186 = vadd.f32 %v184, %v185
  %v187 = vsub.f32 0.0, %v173
  %v188 = vsub.f32 0.0, %v186
  %v189 = vand.u32 2147483647, %v24
  %vm190 = vcmp.le.f32.partialorder %v189, 0.7853982
  %vm191 = vcmp.lt.s32.totalorder %v24, 0
  %v192 = vand.u32 %v24, 2139095040
  %v193 = vshrl.u32 %v192, 23
  %v194 = vsub.s32 %v193, 127
  %v195 = vand.u32 2147483647, %v24
  %v196 = vand.u32 %v195, 8388607
  %v197 = vor.u32 %v196, 8388608
  %v198 = vsub.s32 0, %v197
  %v199 = vadd.s32 %v194, 1
  %vm200 = vcmp.gt.s32.totalorder %v199, 0
  %v201 = vsel %vm200, %v199, 0
  %v202 = vshrl.u32 %v201, 5
  %v203 = vand.u32 %v201, 31
  %v204 = vsub.s32 32, %v203
  %v205 = vshrl.u32 683565275, %v204
  %v206 = vshll.u32 683565275, %v203
  %v207 = vshrl.u32 2475754826, %v204
  %v208 = vor.u32 %v206, %v207
  %v209 = vshll.u32 2475754826, %v203
  %v210 = vshrl.u32 2131351028, %v204
  %v211 = vor.u32 %v209, %v210
  %v212 = vshll.u32 2131351028, %v203
  %v213 = vshrl.u32 2102212464, %v204
  %v214 = vor.u32 %v212, %v213
  %v215 = vshll.u32 2102212464, %v203
  %v216 = vshrl.u32 920167782, %v204
  %v217 = vor.u32 %v215, %v216
  %v218 = vshll.u32 920167782, %v203
  %v219 = vshrl.u32 1326507024, %v204
  %v220 = vor.u32 %v218, %v219
  %vm221 = vcmp.lt.s32.totalorder %v202, 1
  %vm222 = vcmp.lt.s32.totalorder %v202, 2
  %vm223 = vcmp.lt.s32.totalorder %v202, 3
  %vm224 = vcmp.lt.s32.totalorder %v202, 4
  %v225 = vsel %vm221, %v205, %v208
  %v226 = vsel %vm224, %v214, 2102212464
  %v227 = vsel %vm223, %v211, %v226
  %v228 = vsel %vm222, %v225, %v227
  %v229 = vsel %vm221, %v208, %v211
  %v230 = vsel %vm224, %v217, 920167782
  %v231 = vsel %vm223, %v214, %v230
  %v232 = vsel %vm222, %v229, %v231
  %v233 = vsel %vm221, %v211, %v214
  %v234 = vsel %vm224, %v220, 1326507024
  %v235 = vsel %vm223, %v217, %v234
  %v236 = vsel %vm222, %v233, %v235
  %v237 = vshll.u32 %v197, 8
  %v238 = vmul.u32.u64.compose %v237, %v236
  %v239 = vextract.low.u32 %v238
  %v240 = vextract.high.u32 %v238
  %v241 = vmul.u32.u64.compose %v237, %v232
  %v242 = vextract.low.u32 %v241
  %v243 = vextract.high.u32 %v241
  %v244 = vmul.u32 %v237, %v228
  %v245 = vadd.s32 %v240, %v242
  %vm246 = vc.u32 %v240, %v242
  %v247 = vadd.s32 %v243, 1
  %v248 = vsel %vm246, %v247, %v243
  %v249 = vadd.s32 %v244, %v248
  %v250 = vadd.s32 %v249, 536870912
  %v251 = vshrl.u32 %v250, 30
  %v252 = vshll.u32 %v251, 30
  %v253 = vsub.s32 %v249, %v252
  %vm254 = vcmp.lt.s32.totalorder %v253, 0
  %v255 = vsub.s32 0, %v253
  %v256 = vsel %vm254, %v255, %v253
  %v257 = vclz %v256
  %v258 = vsub.s32 %v257, 2
  %vm259 = vcmp.gt.s32.totalorder 0, %v258
  %v260 = vsel %vm259, 0, %v258
  %v261 = vsub.s32 32, %v260
  %v262 = vshll.u32 %v253, %v260
  %v263 = vshrl.u32 %v245, %v261
  %v264 = vor.u32 %v262, %v263
  %v265 = vsub.s32 4294967266, %v260
  %v266 = vadd.s32 %v265, 127
  %v267 = vshll.u32 %v266, 23
  %v268 = vor.u32 4788187, %v267
  %v269 = vand.u32 2147483647, %v268
  %v271 = vcvt.s32.f32 %v264
  %v272 = vmul.f32 %v271, %v269
  %v273 = vxor.u32 %v272, 2147483648
  %v274 = vsel %vm191, %v273, %v272
  %v275 = vsub.s32 4, %v251
  %v276 = vsel %vm191, %v275, %v251
  %v277 = vsel %vm190, %v24, %v274
  %v278 = vsel %vm190, 0, %v276
  %v279 = vcosq.f32.pop %v277
  %v280 = vsinq.f32.pop %v277
  %vm281 = vweird.f32 %v24
  %v282 = vand.u32 %v278, 3
  %vm283 = vcmp.lt.s32.totalorder %v282, 2
  %vm284 = vcmp.eq.s32.totalorder %v282, 0
  %v285 = vxor.u32 %v280, 2147483648
  %v286 = vsel %vm284, %v279, %v285
  %vm287 = vcmp.eq.s32.totalorder %v282, 2
  %v288 = vxor.u32 %v279, 2147483648
  %v289 = vsel %vm287, %v288, %v280
  %v290 = vsel %vm283, %v286, %v289
  %v291 = vsel %vm281, nan, %v290
  %v292 = vand.u32 2147483647, %v24
  %vm293 = vcmp.le.f32.partialorder %v292, 0.7853982
  %vm294 = vcmp.lt.s32.totalorder %v24, 0
  %v295 = vand.u32 %v24, 2139095040
  %v296 = vshrl.u32 %v295, 23
  %v297 = vsub.s32 %v296, 127
  %v298 = vand.u32 2147483647, %v24
  %v299 = vand.u32 %v298, 8388607
  %v300 = vor.u32 %v299, 8388608
  %v301 = vsub.s32 0, %v300
  %v302 = vadd.s32 %v297, 1
  %vm303 = vcmp.gt.s32.totalorder %v302, 0
  %v304 = vsel %vm303, %v302, 0
  %v305 = vshrl.u32 %v304, 5
  %v306 = vand.u32 %v304, 31
  %v307 = vsub.s32 32, %v306
  %v308 = vshrl.u32 683565275, %v307
  %v309 = vshll.u32 683565275, %v306
  %v310 = vshrl.u32 2475754826, %v307
  %v311 = vor.u32 %v309, %v310
  %v312 = vshll.u32 2475754826, %v306
  %v313 = vshrl.u32 2131351028, %v307
  %v314 = vor.u32 %v312, %v313
  %v315 = vshll.u32 2131351028, %v306
  %v316 = vshrl.u32 2102212464, %v307
  %v317 = vor.u32 %v315, %v316
  %v318 = vshll.u32 2102212464, %v306
  %v319 = vshrl.u32 920167782, %v307
  %v320 = vor.u32 %v318, %v319
  %v321 = vshll.u32 920167782, %v306
  %v322 = vshrl.u32 1326507024, %v307
  %v323 = vor.u32 %v321, %v322
  %vm324 = vcmp.lt.s32.totalorder %v305, 1
  %vm325 = vcmp.lt.s32.totalorder %v305, 2
  %vm326 = vcmp.lt.s32.totalorder %v305, 3
  %vm327 = vcmp.lt.s32.totalorder %v305, 4
  %v328 = vsel %vm324, %v308, %v311
  %v329 = vsel %vm327, %v317, 2102212464
  %v330 = vsel %vm326, %v314, %v329
  %v331 = vsel %vm325, %v328, %v330
  %v332 = vsel %vm324, %v311, %v314
  %v333 = vsel %vm327, %v320, 920167782
  %v334 = vsel %vm326, %v317, %v333
  %v335 = vsel %vm325, %v332, %v334
  %v336 = vsel %vm324, %v314, %v317
  %v337 = vsel %vm327, %v323, 1326507024
  %v338 = vsel %vm326, %v320, %v337
  %v339 = vsel %vm325, %v336, %v338
  %v340 = vshll.u32 %v300, 8
  %v341 = vmul.u32.u64.compose %v340, %v339
  %v342 = vextract.low.u32 %v341
  %v343 = vextract.high.u32 %v341
  %v344 = vmul.u32.u64.compose %v340, %v335
  %v345 = vextract.low.u32 %v344
  %v346 = vextract.high.u32 %v344
  %v347 = vmul.u32 %v340, %v331
  %v348 = vadd.s32 %v343, %v345
  %vm349 = vc.u32 %v343, %v345
  %v350 = vadd.s32 %v346, 1
  %v351 = vsel %vm349, %v350, %v346
  %v352 = vadd.s32 %v347, %v351
  %v353 = vadd.s32 %v352, 536870912
  %v354 = vshrl.u32 %v353, 30
  %v355 = vshll.u32 %v354, 30
  %v356 = vsub.s32 %v352, %v355
  %vm357 = vcmp.lt.s32.totalorder %v356, 0
  %v358 = vsub.s32 0, %v356
  %v359 = vsel %vm357, %v358, %v356
  %v360 = vclz %v359
  %v361 = vsub.s32 %v360, 2
  %vm362 = vcmp.gt.s32.totalorder 0, %v361
  %v363 = vsel %vm362, 0, %v361
  %v364 = vsub.s32 32, %v363
  %v365 = vshll.u32 %v356, %v363
  %v366 = vshrl.u32 %v348, %v364
  %v367 = vor.u32 %v365, %v366
  %v368 = vsub.s32 4294967266, %v363
  %v369 = vadd.s32 %v368, 127
  %v370 = vshll.u32 %v369, 23
  %v371 = vor.u32 4788187, %v370
  %v372 = vand.u32 2147483647, %v371
  %v374 = vcvt.s32.f32 %v367
  %v375 = vmul.f32 %v374, %v372
  %v376 = vxor.u32 %v375, 2147483648
  %v377 = vsel %vm294, %v376, %v375
  %v378 = vsub.s32 4, %v354
  %v379 = vsel %vm294, %v378, %v354
  %v380 = vsel %vm293, %v24, %v377
  %v381 = vsel %vm293, 0, %v379
  %v382 = vcosq.f32.pop %v380
  %v383 = vsinq.f32.pop %v380
  %vm384 = vweird.f32 %v24
  %v385 = vadd.s32 %v381, 3
  %v386 = vand.u32 %v385, 3
  %vm387 = vcmp.lt.s32.totalorder %v386, 2
  %vm388 = vcmp.eq.s32.totalorder %v386, 0
  %v389 = vxor.u32 %v383, 2147483648
  %v390 = vsel %vm388, %v382, %v389
  %vm391 = vcmp.eq.s32.totalorder %v386, 2
  %v392 = vxor.u32 %v382, 2147483648
  %v393 = vsel %vm391, %v392, %v383
  %v394 = vsel %vm387, %v390, %v393
  %v395 = vsel %vm384, nan, %v394
  %v396 = vmul.f32 %v395, %v395
  %v397 = vmul.f32 %v396, 2.0
  %v398 = vsub.f32 1.0, %v397
  %v400 = vrot.slane %v24, 1
  %v402 = vadd.f32 %v24, %v400
  %v403 = vand.u32 2147483647, %v402
  %vm404 = vcmp.le.f32.partialorder %v403, 0.7853982
  %vm405 = vcmp.lt.s32.totalorder %v402, 0
  %v406 = vand.u32 %v402, 2139095040
  %v407 = vshrl.u32 %v406, 23
  %v408 = vsub.s32 %v407, 127
  %v409 = vand.u32 2147483647, %v402
  %v410 = vand.u32 %v409, 8388607
  %v411 = vor.u32 %v410, 8388608
  %v412 = vsub.s32 0, %v411
  %v413 = vadd.s32 %v408, 1
  %vm414 = vcmp.gt.s32.totalorder %v413, 0
  %v415 = vsel %vm414, %v413, 0
  %v416 = vshrl.u32 %v415, 5
  %v417 = vand.u32 %v415, 31
  %v418 = vsub.s32 32, %v417
  %v419 = vshrl.u32 683565275, %v418
  %v420 = vshll.u32 683565275, %v417
  %v421 = vshrl.u32 2475754826, %v418
  %v422 = vor.u32 %v420, %v421
  %v423 = vshll.u32 2475754826, %v417
  %v424 = vshrl.u32 2131351028, %v418
  %v425 = vor.u32 %v423, %v424
  %v426 = vshll.u32 2131351028, %v417
  %v427 = vshrl.u32 2102212464, %v418
  %v428 = vor.u32 %v426, %v427
  %v429 = vshll.u32 2102212464, %v417
  %v430 = vshrl.u32 920167782, %v418
  %v431 = vor.u32 %v429, %v430
  %v432 = vshll.u32 920167782, %v417
  %v433 = vshrl.u32 1326507024, %v418
  %v434 = vor.u32 %v432, %v433
  %vm435 = vcmp.lt.s32.totalorder %v416, 1
  %vm436 = vcmp.lt.s32.totalorder %v416, 2
  %vm437 = vcmp.lt.s32.totalorder %v416, 3
  %vm438 = vcmp.lt.s32.totalorder %v416, 4
  %v439 = vsel %vm435, %v419, %v422
  %v440 = vsel %vm438, %v428, 2102212464
  %v441 = vsel %vm437, %v425, %v440
  %v442 = vsel %vm436, %v439, %v441
  %v443 = vsel %vm435, %v422, %v425
  %v444 = vsel %vm438, %v431, 920167782
  %v445 = vsel %vm437, %v428, %v444
  %v446 = vsel %vm436, %v443, %v445
  %v447 = vsel %vm435, %v425, %v428
  %v448 = vsel %vm438, %v434, 1326507024
  %v449 = vsel %vm437, %v431, %v448
  %v450 = vsel %vm436, %v447, %v449
  %v451 = vshll.u32 %v411, 8
  %v452 = vmul.u32.u64.compose %v451, %v450
  %v453 = vextract.low.u32 %v452
  %v454 = vextract.high.u32 %v452
  %v455 = vmul.u32.u64.compose %v451, %v446
  %v456 = vextract.low.u32 %v455
  %v457 = vextract.high.u32 %v455
  %v458 = vmul.u32 %v451, %v442
  %v459 = vadd.s32 %v454, %v456
  %vm460 = vc.u32 %v454, %v456
  %v461 = vadd.s32 %v457, 1
  %v462 = vsel %vm460, %v461, %v457
  %v463 = vadd.s32 %v458, %v462
  %v464 = vadd.s32 %v463, 536870912
  %v465 = vshrl.u32 %v464, 30
  %v466 = vshll.u32 %v465, 30
  %v467 = vsub.s32 %v463, %v466
  %vm468 = vcmp.lt.s32.totalorder %v467, 0
  %v469 = vsub.s32 0, %v467
  %v470 = vsel %vm468, %v469, %v467
  %v471 = vclz %v470
  %v472 = vsub.s32 %v471, 2
  %vm473 = vcmp.gt.s32.totalorder 0, %v472
  %v474 = vsel %vm473, 0, %v472
  %v475 = vsub.s32 32, %v474
  %v476 = vshll.u32 %v467, %v474
  %v477 = vshrl.u32 %v459, %v475
  %v478 = vor.u32 %v476, %v477
  %v479 = vsub.s32 4294967266, %v474
  %v480 = vadd.s32 %v479, 127
  %v481 = vshll.u32 %v480, 23
  %v482 = vor.u32 4788187, %v481
  %v483 = vand.u32 2147483647, %v482
  %v485 = vcvt.s32.f32 %v478
  %v486 = vmul.f32 %v485, %v483
  %v487 = vxor.u32 %v486, 2147483648
  %v488 = vsel %vm405, %v487, %v486
  %v489 = vsub.s32 4, %v465
  %v490 = vsel %vm405, %v489, %v465
  %v491 = vsel %vm404, %v402, %v488
  %v492 = vsel %vm404, 0, %v490
  %v493 = vcosq.f32.pop %v491
  %v494 = vsinq.f32.pop %v491
  %vm495 = vweird.f32 %v402
  %v496 = vadd.s32 %v492, 3
  %v497 = vand.u32 %v496, 3
  %vm498 = vcmp.lt.s32.totalorder %v497, 2
  %vm499 = vcmp.eq.s32.totalorder %v497, 0
  %v500 = vxor.u32 %v494, 2147483648
  %v501 = vsel %vm499, %v493, %v500
  %vm502 = vcmp.eq.s32.totalorder %v497, 2
  %v503 = vxor.u32 %v493, 2147483648
  %v504 = vsel %vm502, %v503, %v494
  %v505 = vsel %vm498, %v501, %v504
  %v506 = vsel %vm495, nan, %v505
  %v507 = vmul.f32 %v291, %v291
  %v508 = vsub.f32 0.0, %v507
  %v509 = vadd.f32 %v508, 1.0
  %v510 = vadd.f32 %v509, 1.0
  %v511 = vrcp.pop %v510
  %v512 = vmul.f32 1.0, %v511
  %v513 = vadd.f32 %v291, 1.0
  %v515 = vrot.slane %v513, 6
  %v517 = vmul.f32 %v24, %v515
  %v519 = vrot.slane %v517, 1
  %v521 = vsub.f32 %v24, %v519
  %v523 = vrot.slane %v512, 7
  %v525 = vmul.f32 %v521, %v523
  %v526 = vmul.f32 %v291, 2.0
  %v527 = vadd.f32 %v526, 2.0
  %v528 = vadd.f32 %v527, 1.0
  %v530 = vrot.slane %v528, 6
  %v532 = vmul.f32 %v24, %v530
  %v533 = vrot.slane %v513, 7
  %v535 = vmul.f32 %v24, %v533
  %v537 = vrot.slane %v535, 7
  %v539 = vsub.f32 %v532, %v537
  %v540 = vrot.slane %v512, 6
  %v542 = vmul.f32 %v539, %v540
  %v543 = vmul.f32 %v395, 2.0
  %v544 = vadd.f32 %v506, %v543
  %v545 = vmul.f32 %v544, -9.81
  %v546 = vadd.f32 %v545, %v187
  %v547 = vadd.f32 %v396, 1.0
  %v548 = vmul.f32 %v547, %v547
  %v549 = vrcp.pop %v548
  %v550 = vmul.f32 1.0, %v549
  %v551 = vsub.f32 0.0, %v24
  %v552 = vmul.f32 %v551, %v24
  %v554 = vrot.slane %v395, 6
  %v556 = vmul.f32 %v552, %v554
  %v557 = vmul.f32 %v556, %v515
  %v558 = vadd.f32 %v291, 2.0
  %v560 = vrot.slane %v558, 6
  %v562 = vmul.f32 %v557, %v560
  %v563 = vmul.f32 %v24, 0.5
  %v564 = vmul.f32 %v563, %v400
  %v565 = vrot.slane %v395, 7
  %v567 = vmul.f32 %v564, %v565
  %v568 = vmul.f32 %v291, 4.0
  %v569 = vadd.f32 %v398, 3.0
  %v570 = vadd.f32 %v569, 2.0
  %v571 = vadd.f32 %v568, %v570
  %v573 = vrot.slane %v571, 7
  %v575 = vmul.f32 %v567, %v573
  %v577 = vrot.slane %v575, 7
  %v579 = vadd.f32 %v562, %v577
  %v580 = vsub.f32 0.0, %v291
  %v581 = vmul.f32 %v580, %v400
  %v582 = vmul.f32 %v581, %v400
  %v583 = vmul.f32 %v582, %v395
  %v584 = vmul.f32 %v506, 9.81
  %v585 = vmul.f32 %v24, 2.0
  %v586 = vsub.f32 3.1415927, %v585
  %v587 = vmul.f32 %v586, 0.5
  %v589 = vrot.slane %v587, 1
  %v591 = vsub.f32 %v584, %v589
  %v593 = vrot.slane %v591, 7
  %v595 = vmul.f32 %v548, %v593
  %v596 = vadd.f32 %v583, %v595
  %v598 = vrot.slane %v596, 6
  %v600 = vadd.f32 %v579, %v598
  %v602 = vrot.slane %v600, 2
  %v604 = vmul.f32 %v550, %v602
  %v605 = vsub.f32 0.0, %v604
  %v606 = vadd.f32 %v605, %v188
  %s607 = sld [smem:[#allocation2]]
  %s608 = sand.u32 2147483647, %s607
  %v609 = vstv %s608
  %v610 = vmul.f32 %v609, %v525
  %611 = vst [vmem:[%s6 - $0x2] sm:$0x4] %v610
  %v612 = vmul.f32 %v609, %v542
  %613 = vst [vmem:[%s6 - $0x2] sm:$0x8] %v612
  %v614 = vmul.f32 %v609, %v546
  %615 = vst [vmem:[%s6 + $0x2] sm:$0x1] %v614
  %v616 = vmul.f32 %v609, %v606
  %617 = vst [vmem:[%s6 + $0x2] sm:$0x2] %v616
  // Predicated region
  $region26: #{controlled_system_forward.1} parent=0 // pred_check
    _
  $region27: #{controlled_system_forward.1} parent=0 // pred_check_branch
    %619 = sbr.rel (0) target = $region29
  $region28: #{controlled_system_forward.1} parent=0 // pred_region
    _
  $region29: #{controlled_system_forward.1} parent=0 // pred_fallthru
    _
  // Predicated region
  $region30: #{controlled_system_forward.1} parent=0 // pred_check
    _
  $region31: #{controlled_system_forward.1} parent=0 // pred_check_branch
    %621 = sbr.rel (0) target = $region33
  $region32: #{controlled_system_forward.1} parent=0 // pred_region
    _
  $region33: #{controlled_system_forward.1} parent=0 // pred_fallthru
    _

</llo_original>
